<compile_context>
chip_gen: v6e
topology: v6e:2x2x1
jax: 0.10.0
libtpu: 0.0.40
codegen_flags: <defaults>
</compile_context>

<pallas_src>
import functools

import jax
import jax.numpy as jnp
from jax.experimental import pallas as pl
from jax.experimental.pallas import tpu as pltpu

EPS = 0.2
IGNORE_INDEX = -1


def _instance_loss_kernel(x_ref, tgt_ref, w_ref, out_ref, acc_ref, *,
                          n_total, tm, ignore_index):
    p = pl.program_id(0)
    t = pl.program_id(1)
    tpc = pl.num_programs(1)

    @pl.when(t == 0)
    def _():
        acc_ref[...] = jnp.zeros_like(acc_ref)

    x = x_ref[...].astype(jnp.float32)      # (TM, C) logits, f32 math
    tgt = tgt_ref[...]                      # (TM, 1) int32 labels
    w = w_ref[...].astype(jnp.float32)      # (TM, 1) pre-normalized token weights

    c = x.shape[-1]

    # ---- stable log-sum-exp over classes (lanes); no materialized log_preds ----
    m = jnp.max(x, axis=-1, keepdims=True)
    z = x - m
    lse = jnp.log(jnp.sum(jnp.exp(z), axis=-1, keepdims=True))      # (TM, 1)

    # picked[i] = z[i, tgt[i]]  (0 when tgt is out of range / ignored)
    cols = jax.lax.broadcasted_iota(jnp.int32, (1, c), 1)           # (1, C)
    picked = jnp.sum(jnp.where(cols == tgt, z, 0.0),
                     axis=-1, keepdims=True)                        # (TM, 1)
    nll = lse - picked                                              # (TM, 1)

    # ---- mask out padded rows and ignore_index rows (load-bearing!) ----
    gblock = p * tpc + t
    rows = gblock * tm + jax.lax.broadcasted_iota(jnp.int32, (tm, 1), 0)
    keep = (rows < n_total) & (tgt != ignore_index)
    acc_ref[...] += jnp.where(keep, w * nll, 0.0)

    @pl.when(t == tpc - 1)
    def _():
        out_ref[...] = jnp.sum(acc_ref[...]).reshape(1, 1, 1)


def _pick_tm(n, c, itemsize, budget=8 << 20):
    """Largest row-tile whose double-buffered logits block stays <= ~8 MiB
    (safe for v7x's 64 MiB VMEM / 32 MiB scoped default; v5e/v6e have more)."""
    if n <= 8:
        return max(n, 1)
    tm = 1024
    while tm > 8 and 2 * tm * c * itemsize > budget:
        tm //= 2
    n_round8 = ((n + 7) // 8) * 8
    return min(tm, n_round8)


def instance_loss(inputs, target, weights, *, eps=EPS,
                  ignore_index=IGNORE_INDEX, tm=None):
    """inputs: (N, C) float (any dtype); target: (N,) int; weights: (N,) float -> scalar."""
    n, c = inputs.shape
    itemsize = jnp.dtype(inputs.dtype).itemsize
    if tm is None:
        tm = _pick_tm(n, c, itemsize)

    # Token-weight softmax touches only O(N) data -> do it in plain XLA so the
    # kernel's N tiles are independent partial sums.
    tgt1d = target.astype(jnp.int32)
    mask = jnp.where(tgt1d == 0, jnp.float32(eps), jnp.float32(1.0))
    sm = jax.nn.softmax(mask + weights.astype(jnp.float32), axis=-1)

    tgt2d = tgt1d.reshape(n, 1)
    sm2d = sm.reshape(n, 1)

    nblocks = pl.cdiv(n, tm)
    p_axis = 2 if nblocks >= 2 else 1       # 2-way TC split on v7x, harmless elsewhere
    tpc = pl.cdiv(nblocks, p_axis)
    last_block = nblocks - 1

    def row_map(p, t):
        # Clamp so the DMA never reads a fully out-of-range block; duplicate
        # (clamped) blocks are zeroed by the in-kernel row mask.
        return (jnp.minimum(p * tpc + t, last_block), 0)

    kernel = functools.partial(_instance_loss_kernel,
                               n_total=n, tm=tm, ignore_index=ignore_index)

    cost = pl.CostEstimate(
        flops=6 * n * c,
        transcendentals=n * c + n,
        bytes_accessed=n * c * itemsize + 2 * n * 4 + p_axis * 4,
    )

    out = pl.pallas_call(
        kernel,
        out_shape=jax.ShapeDtypeStruct((p_axis, 1, 1), jnp.float32),
        grid_spec=pltpu.PrefetchScalarGridSpec(
            num_scalar_prefetch=0,
            grid=(p_axis, tpc),
            in_specs=[
                pl.BlockSpec((tm, c), row_map),   # logits tile (native dtype)
                pl.BlockSpec((tm, 1), row_map),   # targets tile
                pl.BlockSpec((tm, 1), row_map),   # normalized weights tile
            ],
            out_specs=pl.BlockSpec((1, 1, 1), lambda p, t: (p, 0, 0)),
            scratch_shapes=[pltpu.VMEM((tm, 1), jnp.float32)],
        ),
        compiler_params=pltpu.CompilerParams(
            dimension_semantics=("parallel", "arbitrary"),
        ),
        cost_estimate=cost,
    )(inputs, tgt2d, sm2d)

    return jnp.sum(out)


def _reference(inputs, target, weights):
    # pure-JAX reference mirroring the PyTorch forward
    log_preds = jax.nn.log_softmax(inputs.astype(jnp.float32), axis=-1)
    n, c = inputs.shape
    safe_tgt = jnp.where(target == IGNORE_INDEX, 0, target)
    picked = jnp.take_along_axis(log_preds, safe_tgt.reshape(n, 1), axis=1)[:, 0]
    loss = jnp.where(target == IGNORE_INDEX, 0.0, -picked)
    mask = jnp.where(target == 0, EPS, 1.0).astype(jnp.float32)
    w = jax.nn.softmax(mask + weights.astype(jnp.float32), axis=-1)
    return jnp.dot(w, loss)


if __name__ == "__main__":
    # N = 112 (not a multiple of the 32-row tile) to exercise the partial-block
    # masking path and a real multi-step grid: grid = (2, 2) with TM = 32.
    batch, seq, num_classes = 2, 56, 32
    n = batch * seq

    key = jax.random.PRNGKey(0)
    k1, k2, k3 = jax.random.split(key, 3)
    inputs = jax.random.normal(k1, (n, num_classes), dtype=jnp.float32)
    target = jax.random.randint(k2, (n,), 0, num_classes, dtype=jnp.int32)
    # exercise both the ignore_index branch and the target==0 (eps) branch
    target = target.at[3].set(IGNORE_INDEX).at[5].set(0)
    weights = jax.random.uniform(k3, (n,), dtype=jnp.float32)

    out = instance_loss(inputs, target, weights, tm=32)
    jax.block_until_ready(out)
    ref = _reference(inputs, target, weights)
    assert jnp.allclose(out, ref, atol=2e-5, rtol=2e-5), (out, ref)

    # bf16 logits stream (half the HBM bytes); math stays f32 inside the kernel.
    inputs_bf16 = inputs.astype(jnp.bfloat16)
    out_bf16 = instance_loss(inputs_bf16, target, weights, tm=32)
    jax.block_until_ready(out_bf16)
    ref_bf16 = _reference(inputs_bf16, target, weights)
    assert jnp.allclose(out_bf16, ref_bf16, atol=1e-4, rtol=1e-4), (out_bf16, ref_bf16)

    print("KERNEL_OK")
</pallas_src>

<mosaic_0001>
module attributes {stable_mosaic.version = 11 : i64} {
  func.func @_instance_loss_kernel(%arg0: i32, %arg1: i32, %arg2: memref<32x32xf32, #tpu.memory_space<vmem>>, %arg3: memref<32x1xi32, #tpu.memory_space<vmem>>, %arg4: memref<32x1xf32, #tpu.memory_space<vmem>>, %arg5: memref<1x1x1xf32, #tpu.memory_space<vmem>>, %arg6: memref<32x1xf32, #tpu.memory_space<vmem>>) attributes {dimension_semantics = [#tpu.dimension_semantics<parallel>, #tpu.dimension_semantics<arbitrary>], iteration_bounds = array<i64: 2, 2>, scalar_prefetch = 0 : i64, scratch_operands = 1 : i64, tpu.core_type = #tpu.core_type<tc>, window_params = [{transform_indices = @transform_0, window_bounds = array<i64: 32, 32>}, {transform_indices = @transform_1, window_bounds = array<i64: 32, 1>}, {transform_indices = @transform_2, window_bounds = array<i64: 32, 1>}, {transform_indices = @transform_3, window_bounds = array<i64: 1, 1, 1>}]} {
    %c0_i32 = arith.constant 0 : i32
    %0 = arith.cmpi eq, %arg1, %c0_i32 : i32
    %1 = arith.extui %0 : i1 to i32
    %c0_i32_0 = arith.constant 0 : i32
    %2 = arith.cmpi ne, %1, %c0_i32_0 : i32
    scf.if %2 {
      %cst_15 = arith.constant 0.000000e+00 : f32
      %43 = vector.broadcast %cst_15 : f32 to vector<32x1xf32>
      %c0_16 = arith.constant 0 : index
      %c0_17 = arith.constant 0 : index
      %44 = vector.load %arg6[%c0_16, %c0_17] : memref<32x1xf32, #tpu.memory_space<vmem>>, vector<32x1xf32>
      tpu.vector_store %arg6[%c0_16, %c0_17], %43 {strides = array<i32>} : memref<32x1xf32, #tpu.memory_space<vmem>>, vector<32x1xf32>,
    } else {
    }
    %c0 = arith.constant 0 : index
    %c0_1 = arith.constant 0 : index
    %3 = vector.load %arg2[%c0, %c0_1] : memref<32x32xf32, #tpu.memory_space<vmem>>, vector<32x32xf32>
    %c0_2 = arith.constant 0 : index
    %c0_3 = arith.constant 0 : index
    %4 = vector.load %arg3[%c0_2, %c0_3] : memref<32x1xi32, #tpu.memory_space<vmem>>, vector<32x1xi32>
    %c0_4 = arith.constant 0 : index
    %c0_5 = arith.constant 0 : index
    %5 = vector.load %arg4[%c0_4, %c0_5] : memref<32x1xf32, #tpu.memory_space<vmem>>, vector<32x1xf32>
    %cst = arith.constant dense<0xFF800000> : vector<32xf32>
    %6 = vector.multi_reduction <maximumf>, %3, %cst [1] : vector<32x32xf32> to vector<32xf32>
    %7 = vector.shape_cast %6 : vector<32xf32> to vector<32x1xf32>
    %8 = vector.broadcast %7 : vector<32x1xf32> to vector<32x32xf32>
    %9 = arith.subf %3, %8 : vector<32x32xf32>
    %10 = math.exp %9 : vector<32x32xf32>
    %cst_6 = arith.constant dense<0.000000e+00> : vector<32xf32>
    %11 = vector.multi_reduction <add>, %10, %cst_6 [1] : vector<32x32xf32> to vector<32xf32>
    %12 = vector.shape_cast %11 : vector<32xf32> to vector<32x1xf32>
    %13 = math.log %12 : vector<32x1xf32>
    %14 = tpu.iota {dimensions = array<i32: 1>} : vector<1x32xi32>
    %15 = vector.broadcast %14 : vector<1x32xi32> to vector<32x32xi32>
    %16 = vector.broadcast %4 : vector<32x1xi32> to vector<32x32xi32>
    %17 = arith.cmpi eq, %15, %16 : vector<32x32xi32>
    %cst_7 = arith.constant 0.000000e+00 : f32
    %18 = vector.broadcast %cst_7 : f32 to vector<32x32xf32>
    %19 = arith.select %17, %9, %18 : vector<32x32xi1>, vector<32x32xf32>
    %cst_8 = arith.constant dense<0.000000e+00> : vector<32xf32>
    %20 = vector.multi_reduction <add>, %19, %cst_8 [1] : vector<32x32xf32> to vector<32xf32>
    %21 = vector.shape_cast %20 : vector<32xf32> to vector<32x1xf32>
    %22 = arith.subf %13, %21 : vector<32x1xf32>
    %c2_i32 = arith.constant 2 : i32
    %23 = arith.muli %arg0, %c2_i32 : i32
    %24 = arith.addi %23, %arg1 : i32
    %c32_i32 = arith.constant 32 : i32
    %25 = arith.muli %24, %c32_i32 : i32
    %26 = tpu.iota {dimensions = array<i32: 0>} : vector<32x1xi32>
    %27 = vector.broadcast %25 : i32 to vector<32x1xi32>
    %28 = arith.addi %27, %26 : vector<32x1xi32>
    %c112_i32 = arith.constant 112 : i32
    %29 = vector.broadcast %c112_i32 : i32 to vector<32x1xi32>
    %30 = arith.cmpi slt, %28, %29 : vector<32x1xi32>
    %c-1_i32 = arith.constant -1 : i32
    %31 = vector.broadcast %c-1_i32 : i32 to vector<32x1xi32>
    %32 = arith.cmpi ne, %4, %31 : vector<32x1xi32>
    %33 = arith.andi %30, %32 : vector<32x1xi1>
    %c0_9 = arith.constant 0 : index
    %c0_10 = arith.constant 0 : index
    %34 = vector.load %arg6[%c0_9, %c0_10] : memref<32x1xf32, #tpu.memory_space<vmem>>, vector<32x1xf32>
    %35 = arith.mulf %5, %22 : vector<32x1xf32>
    %cst_11 = arith.constant 0.000000e+00 : f32
    %36 = vector.broadcast %cst_11 : f32 to vector<32x1xf32>
    %37 = arith.select %33, %35, %36 : vector<32x1xi1>, vector<32x1xf32>
    %38 = arith.addf %34, %37 : vector<32x1xf32>
    %c0_12 = arith.constant 0 : index
    %c0_13 = arith.constant 0 : index
    %39 = vector.load %arg6[%c0_12, %c0_13] : memref<32x1xf32, #tpu.memory_space<vmem>>, vector<32x1xf32>
    tpu.vector_store %arg6[%c0_12, %c0_13], %38 {strides = array<i32>} : memref<32x1xf32, #tpu.memory_space<vmem>>, vector<32x1xf32>,
    %c1_i32 = arith.constant 1 : i32
    %40 = arith.cmpi eq, %arg1, %c1_i32 : i32
    %41 = arith.extui %40 : i1 to i32
    %c0_i32_14 = arith.constant 0 : i32
    %42 = arith.cmpi ne, %41, %c0_i32_14 : i32
    scf.if %42 {
      %c0_15 = arith.constant 0 : index
      %c0_16 = arith.constant 0 : index
      %43 = vector.load %arg6[%c0_15, %c0_16] : memref<32x1xf32, #tpu.memory_space<vmem>>, vector<32x1xf32>
      %44 = vector.shape_cast %43 : vector<32x1xf32> to vector<1x32x1xf32>
      %cst_17 = arith.constant dense<0.000000e+00> : vector<1xf32>
      %45 = vector.multi_reduction <add>, %44, %cst_17 [1, 2] : vector<1x32x1xf32> to vector<1xf32>
      %46 = vector.shape_cast %45 : vector<1xf32> to vector<1x1x1xf32>
      %47 = vector.extract %46[0, 0, 0] : f32 from vector<1x1x1xf32>
      %48 = vector.broadcast %47 : f32 to vector<1x1x1xf32>
      %c0_18 = arith.constant 0 : index
      %c0_19 = arith.constant 0 : index
      %c0_20 = arith.constant 0 : index
      %49 = vector.load %arg5[%c0_18, %c0_19, %c0_20] : memref<1x1x1xf32, #tpu.memory_space<vmem>>, vector<1x1x1xf32>
      tpu.vector_store %arg5[%c0_18, %c0_19, %c0_20], %48 {strides = array<i32>} : memref<1x1x1xf32, #tpu.memory_space<vmem>>, vector<1x1x1xf32>,
    } else {
    }
    return
  }
  func.func @transform_0(%arg0: i32, %arg1: i32) -> (i32, i32) {
    %c2_i32 = arith.constant 2 : i32
    %0 = arith.muli %arg0, %c2_i32 : i32
    %1 = arith.addi %0, %arg1 : i32
    %c3_i32 = arith.constant 3 : i32
    %2 = arith.minsi %1, %c3_i32 : i32
    %c0_i32 = arith.constant 0 : i32
    %c0_i32_0 = arith.constant 0 : i32
    return %2, %c0_i32 : i32, i32
  }
  func.func @transform_1(%arg0: i32, %arg1: i32) -> (i32, i32) {
    %c2_i32 = arith.constant 2 : i32
    %0 = arith.muli %arg0, %c2_i32 : i32
    %1 = arith.addi %0, %arg1 : i32
    %c3_i32 = arith.constant 3 : i32
    %2 = arith.minsi %1, %c3_i32 : i32
    %c0_i32 = arith.constant 0 : i32
    %c0_i32_0 = arith.constant 0 : i32
    return %2, %c0_i32 : i32, i32
  }
  func.func @transform_2(%arg0: i32, %arg1: i32) -> (i32, i32) {
    %c2_i32 = arith.constant 2 : i32
    %0 = arith.muli %arg0, %c2_i32 : i32
    %1 = arith.addi %0, %arg1 : i32
    %c3_i32 = arith.constant 3 : i32
    %2 = arith.minsi %1, %c3_i32 : i32
    %c0_i32 = arith.constant 0 : i32
    %c0_i32_0 = arith.constant 0 : i32
    return %2, %c0_i32 : i32, i32
  }
  func.func @transform_3(%arg0: i32, %arg1: i32) -> (i32, i32, i32) {
    %c0_i32 = arith.constant 0 : i32
    %c0_i32_0 = arith.constant 0 : i32
    %c0_i32_1 = arith.constant 0 : i32
    return %arg0, %c0_i32, %c0_i32_0 : i32, i32, i32
  }
}

</mosaic_0001>

<llo_original>
// kernel: tpu_custom_call.1
$region0: #{tpu_custom_call.1}
  #allocation0 [shape = 'u32[]', space=smem, size = 0x4, offset = 0x4, fixed_abs, tag = 'smem constant byte address 0x4 - core index']
  #allocation1 [shape = 'u32[144,128]{1,0:T(1,128)}', space=vmem, size = 0x12000, scoped, tag = 'internal scratch']
  #allocation2 [shape = 'f32[32,1]{1,0:T(8,128)}', space=vmem, size = 0x4000, scoped, tag = 'scratch operand']
  %s0 = inlined_call_operand.vmem [shape: f32[112,32], index: 0, kind: input, shape index: {}]
  %s1 = inlined_call_operand.vmem [shape: s32[112,1], index: 1, kind: input, shape index: {}]
  %s2 = inlined_call_operand.vmem [shape: f32[112,1], index: 2, kind: input, shape index: {}]
  %s3 = inlined_call_operand.vmem [shape: f32[2,1,1], index: 3, kind: output, shape index: {}]
  %s4 = sld [smem:[#allocation0]]
  $region53: #{tpu_custom_call.1} parent=0
    _
  %s6 = ssub.s32 1, %s4
  %s7 = scalar_select 0, %s6, %s4
  loop: start=0, step=1, limit=6
  $region2: #{tpu_custom_call.1} parent=0 // loop_pre_header
    _
  $region3: #{tpu_custom_call.1} parent=0 // loop_header
    %s9 = sphi 0, %s13
    %p10 = scmp.ge.s32.totalorder %s9, 6
    %s16 = sphi 0, %s28
    %s17 = sphi 0, %s24
    %s18 = sphi 0, %s16
    %s19 = sphi 0, %s17
    %s20 = sphi 0, %s18
    %s21 = sphi 0, %s19
    %s39 = sphi 0, %s41
    %s42 = sphi 0, %s39
    %s43 = sphi 0, %s42
    %s59 = sphi 0, %s43
    %s73 = sphi 0, %s75
    %s76 = sphi 0, %s73
    %s77 = sphi 0, %s76
    %s93 = sphi 0, %s77
    %s107 = sphi 0, %s109
    %s110 = sphi 0, %s107
    %s111 = sphi 0, %s110
    %s127 = sphi 0, %s111
    %s133 = sphi 0, %s135
    %s136 = sphi 0, %s133
    %s137 = sphi 0, %s136
    %s153 = sphi 0, %s137
  $region4: #{tpu_custom_call.1} parent=0 // loop_header_branch
    %12 = sbr.rel (%p10) target = $region8
  $region5: #{tpu_custom_call.1} parent=0 // loop_body
    %s14 = ssub.s32 %s9, 1
    %s15 = ssub.s32 %s9, 2
    %s22 = sadd.s32 1, %s17
    %p23 = scmp.ge.s32.totalorder %s22, 2
    %s24 = scalar_select %p23, 0, %s22
    %s25 = sadd.s32 1, %s16
    %s26 = scalar_select %p23, %s25, %s16
    %p27 = scmp.ge.s32.totalorder %s26, 2
    %s28 = scalar_select %p27, 0, %s26
    %s29 = smul.u32 %s16, 2
    %s30 = sadd.s32 %s29, %s17
    %p31 = scmp.lt.s32.totalorder %s30, 3
    %s32 = scalar_select %p31, %s30, 3
    %s33 = smul.u32 %s28, 2
    %s34 = sadd.s32 %s33, %s24
    %p35 = scmp.lt.s32.totalorder %s34, 3
    %s36 = scalar_select %p35, %s34, 3
    %s37 = ssub.s32 %s32, %s36
    %p38 = scmp.eq.s32.totalorder %s37, 0
    %s40 = sadd.s32 %s39, 1
    %s41 = scalar_select %p38, %s39, %s40
    %p44 = pneg %p38
    %p45 = scmp.eq.s32.totalorder %s9, 3
    %p46 = por %p44, %p45
    %p47 = scmp.ne.s32.totalorder %s39, %s42
    %p48 = scmp.eq.s32.totalorder %s9, 0
    %p49 = por %p47, %p48
    %p50 = scmp.ne.s32.totalorder %s39, %s42
    %p51 = scmp.eq.s32.totalorder %s14, 3
    %p52 = por %p50, %p51
    %p53 = scmp.ne.s32.totalorder %s42, %s43
    %p54 = scmp.eq.s32.totalorder %s14, 0
    %p55 = por %p53, %p54
    %p56 = scmp.ne.s32.totalorder %s42, %s43
    %p57 = scmp.eq.s32.totalorder %s15, 3
    %p58 = por %p56, %p57
    %p60 = scmp.ne.s32.totalorder %s43, %s59
    %p61 = scmp.eq.s32.totalorder %s15, 0
    %p62 = por %p60, %p61
    %s63 = smul.u32 %s16, 2
    %s64 = sadd.s32 %s63, %s17
    %p65 = scmp.lt.s32.totalorder %s64, 3
    %s66 = scalar_select %p65, %s64, 3
    %s67 = smul.u32 %s28, 2
    %s68 = sadd.s32 %s67, %s24
    %p69 = scmp.lt.s32.totalorder %s68, 3
    %s70 = scalar_select %p69, %s68, 3
    %s71 = ssub.s32 %s66, %s70
    %p72 = scmp.eq.s32.totalorder %s71, 0
    %s74 = sadd.s32 %s73, 1
    %s75 = scalar_select %p72, %s73, %s74
    %p78 = pneg %p72
    %p79 = scmp.eq.s32.totalorder %s9, 3
    %p80 = por %p78, %p79
    %p81 = scmp.ne.s32.totalorder %s73, %s76
    %p82 = scmp.eq.s32.totalorder %s9, 0
    %p83 = por %p81, %p82
    %p84 = scmp.ne.s32.totalorder %s73, %s76
    %p85 = scmp.eq.s32.totalorder %s14, 3
    %p86 = por %p84, %p85
    %p87 = scmp.ne.s32.totalorder %s76, %s77
    %p88 = scmp.eq.s32.totalorder %s14, 0
    %p89 = por %p87, %p88
    %p90 = scmp.ne.s32.totalorder %s76, %s77
    %p91 = scmp.eq.s32.totalorder %s15, 3
    %p92 = por %p90, %p91
    %p94 = scmp.ne.s32.totalorder %s77, %s93
    %p95 = scmp.eq.s32.totalorder %s15, 0
    %p96 = por %p94, %p95
    %s97 = smul.u32 %s16, 2
    %s98 = sadd.s32 %s97, %s17
    %p99 = scmp.lt.s32.totalorder %s98, 3
    %s100 = scalar_select %p99, %s98, 3
    %s101 = smul.u32 %s28, 2
    %s102 = sadd.s32 %s101, %s24
    %p103 = scmp.lt.s32.totalorder %s102, 3
    %s104 = scalar_select %p103, %s102, 3
    %s105 = ssub.s32 %s100, %s104
    %p106 = scmp.eq.s32.totalorder %s105, 0
    %s108 = sadd.s32 %s107, 1
    %s109 = scalar_select %p106, %s107, %s108
    %p112 = pneg %p106
    %p113 = scmp.eq.s32.totalorder %s9, 3
    %p114 = por %p112, %p113
    %p115 = scmp.ne.s32.totalorder %s107, %s110
    %p116 = scmp.eq.s32.totalorder %s9, 0
    %p117 = por %p115, %p116
    %p118 = scmp.ne.s32.totalorder %s107, %s110
    %p119 = scmp.eq.s32.totalorder %s14, 3
    %p120 = por %p118, %p119
    %p121 = scmp.ne.s32.totalorder %s110, %s111
    %p122 = scmp.eq.s32.totalorder %s14, 0
    %p123 = por %p121, %p122
    %p124 = scmp.ne.s32.totalorder %s110, %s111
    %p125 = scmp.eq.s32.totalorder %s15, 3
    %p126 = por %p124, %p125
    %p128 = scmp.ne.s32.totalorder %s111, %s127
    %p129 = scmp.eq.s32.totalorder %s15, 0
    %p130 = por %p128, %p129
    %s131 = ssub.s32 %s16, %s28
    %p132 = scmp.eq.s32.totalorder %s131, 0
    %s134 = sadd.s32 %s133, 1
    %s135 = scalar_select %p132, %s133, %s134
    %p138 = pneg %p132
    %p139 = scmp.eq.s32.totalorder %s9, 3
    %p140 = por %p138, %p139
    %p141 = scmp.ne.s32.totalorder %s133, %s136
    %p142 = scmp.eq.s32.totalorder %s9, 0
    %p143 = por %p141, %p142
    %p144 = scmp.ne.s32.totalorder %s133, %s136
    %p145 = scmp.eq.s32.totalorder %s14, 3
    %p146 = por %p144, %p145
    %p147 = scmp.ne.s32.totalorder %s136, %s137
    %p148 = scmp.eq.s32.totalorder %s14, 0
    %p149 = por %p147, %p148
    %p150 = scmp.ne.s32.totalorder %s136, %s137
    %p151 = scmp.eq.s32.totalorder %s15, 3
    %p152 = por %p150, %p151
    %p154 = scmp.ne.s32.totalorder %s137, %s153
    %p155 = scmp.eq.s32.totalorder %s15, 0
    %p156 = por %p154, %p155
    %p157 = scmp.le.s32.totalorder 1, %s9
    %p158 = scmp.lt.s32.totalorder %s9, 5
    %p159 = pnand %p157, %p158
    %p160 = pneg %p159
    // Predicated region
    $region9: #{tpu_custom_call.1} parent=5 // pred_check
      _
    $region10: #{tpu_custom_call.1} parent=5 // pred_check_branch
      %162 = sbr.rel (%p159) target = $region12
    $region11: #{tpu_custom_call.1} parent=5 // pred_region
      %s163 = ssub.s32 %s9, 1
    $region12: #{tpu_custom_call.1} parent=5 // pred_fallthru
      _
    %p164 = scmp.lt.s32.totalorder %s9, 4
    // Predicated region
    $region13: #{tpu_custom_call.1} parent=5 // pred_check
      %p165 = pneg %p164
    $region14: #{tpu_custom_call.1} parent=5 // pred_check_branch
      %167 = sbr.rel (%p165) target = $region16
    $region15: #{tpu_custom_call.1} parent=5 // pred_region
      // Predicated region
      $region17: #{tpu_custom_call.1} parent=15 // pred_check
        %p168 = pneg %p49
      $region18: #{tpu_custom_call.1} parent=15 // pred_check_branch
        %170 = sbr.rel (%p168) target = $region20
      $region19: #{tpu_custom_call.1} parent=15 // pred_region
        %s171 = smul.u32 %s16, 2
        %s172 = sadd.s32 %s171, %s17
        %p173 = scmp.lt.s32.totalorder %s172, 3
        %s174 = scalar_select %p173, %s172, 3
        %s175 = smul.u32 4, %s174
        %s176 = ssub.s32 14, %s175
        %p177 = scmp.lt.s32.totalorder %s176, 4
        %s178 = scalar_select %p177, %s176, 4
        %s179 = smul.u32 128, %s178
        %p180 = scmp.lt.s32.totalorder %s175, 13
        %s181 = scalar_select %p180, %s175, 13
        %s182 = smul.addr %s181, 8
        %s183 = scalar_lea.vmem %s0, %s182
        %s184 = smul.u32 %s16, 2
        %s185 = sadd.s32 %s184, %s17
        %p186 = scmp.lt.s32.totalorder %s185, 3
        %s187 = scalar_select %p186, %s185, 3
        %s188 = smul.u32 4, %s187
        %s189 = ssub.s32 14, %s188
        %p190 = scmp.lt.s32.totalorder %s189, 4
        %s191 = scalar_select %p190, %s189, 4
        %s192 = smul.u32 128, %s191
      $region20: #{tpu_custom_call.1} parent=15 // pred_fallthru
        _
      // Predicated region
      $region21: #{tpu_custom_call.1} parent=15 // pred_check
        %p193 = pneg %p83
      $region22: #{tpu_custom_call.1} parent=15 // pred_check_branch
        %195 = sbr.rel (%p193) target = $region24
      $region23: #{tpu_custom_call.1} parent=15 // pred_region
        %s196 = smul.u32 %s16, 2
        %s197 = sadd.s32 %s196, %s17
        %p198 = scmp.lt.s32.totalorder %s197, 3
        %s199 = scalar_select %p198, %s197, 3
        %s200 = smul.u32 4, %s199
        %s201 = ssub.s32 14, %s200
        %p202 = scmp.lt.s32.totalorder %s201, 4
        %s203 = scalar_select %p202, %s201, 4
        %s204 = smul.u32 128, %s203
        %p205 = scmp.lt.s32.totalorder %s200, 13
        %s206 = scalar_select %p205, %s200, 13
        %s207 = smul.addr %s206, 8
        %s208 = scalar_lea.vmem %s1, %s207
        %s209 = smul.u32 %s16, 2
        %s210 = sadd.s32 %s209, %s17
        %p211 = scmp.lt.s32.totalorder %s210, 3
        %s212 = scalar_select %p211, %s210, 3
        %s213 = smul.u32 4, %s212
        %s214 = ssub.s32 14, %s213
        %p215 = scmp.lt.s32.totalorder %s214, 4
        %s216 = scalar_select %p215, %s214, 4
        %s217 = smul.u32 128, %s216
      $region24: #{tpu_custom_call.1} parent=15 // pred_fallthru
        _
      // Predicated region
      $region25: #{tpu_custom_call.1} parent=15 // pred_check
        %p218 = pneg %p117
      $region26: #{tpu_custom_call.1} parent=15 // pred_check_branch
        %220 = sbr.rel (%p218) target = $region28
      $region27: #{tpu_custom_call.1} parent=15 // pred_region
        %s221 = smul.u32 %s16, 2
        %s222 = sadd.s32 %s221, %s17
        %p223 = scmp.lt.s32.totalorder %s222, 3
        %s224 = scalar_select %p223, %s222, 3
        %s225 = smul.u32 4, %s224
        %s226 = ssub.s32 14, %s225
        %p227 = scmp.lt.s32.totalorder %s226, 4
        %s228 = scalar_select %p227, %s226, 4
        %s229 = smul.u32 128, %s228
        %p230 = scmp.lt.s32.totalorder %s225, 13
        %s231 = scalar_select %p230, %s225, 13
        %s232 = smul.addr %s231, 8
        %s233 = scalar_lea.vmem %s2, %s232
        %s234 = smul.u32 %s16, 2
        %s235 = sadd.s32 %s234, %s17
        %p236 = scmp.lt.s32.totalorder %s235, 3
        %s237 = scalar_select %p236, %s235, 3
        %s238 = smul.u32 4, %s237
        %s239 = ssub.s32 14, %s238
        %p240 = scmp.lt.s32.totalorder %s239, 4
        %s241 = scalar_select %p240, %s239, 4
        %s242 = smul.u32 128, %s241
      $region28: #{tpu_custom_call.1} parent=15 // pred_fallthru
        _
    $region16: #{tpu_custom_call.1} parent=5 // pred_fallthru
      _
    %p243 = scmp.le.s32.totalorder 1, %s9
    %p244 = scmp.lt.s32.totalorder %s9, 5
    %p245 = pnand %p243, %p244
    %p246 = pneg %p245
    // Predicated region
    $region29: #{tpu_custom_call.1} parent=5 // pred_check
      _
    $region30: #{tpu_custom_call.1} parent=5 // pred_check_branch
      %248 = sbr.rel (%p245) target = $region32
    $region31: #{tpu_custom_call.1} parent=5 // pred_region
      %s249 = ssub.s32 %s9, 1
      %s250 = smul.u32 %s18, 2
      %s251 = sadd.s32 %s250, %s19
      %p252 = scmp.lt.s32.totalorder %s251, 3
      %s253 = scalar_select %p252, %s251, 3
      %s254 = smul.u32 4, %s253
      %s255 = ssub.s32 14, %s254
      %p256 = scmp.lt.s32.totalorder %s255, 4
      %s257 = scalar_select %p256, %s255, 4
      %s258 = smul.u32 128, %s257
      %p259 = scmp.lt.s32.totalorder %s254, 13
      %s260 = scalar_select %p259, %s254, 13
      %s261 = smul.addr %s260, 8
      %s262 = scalar_lea.vmem %s0, %s261
      %p263 = pneg %p55
      %p264 = pneg %p52
      %s265 = smul.u32 %s18, 2
      %s266 = sadd.s32 %s265, %s19
      %p267 = scmp.lt.s32.totalorder %s266, 3
      %s268 = scalar_select %p267, %s266, 3
      %s269 = smul.u32 4, %s268
      %s270 = ssub.s32 14, %s269
      %p271 = scmp.lt.s32.totalorder %s270, 4
      %s272 = scalar_select %p271, %s270, 4
      %s273 = smul.u32 128, %s272
      %p274 = scmp.lt.s32.totalorder %s269, 13
      %s275 = scalar_select %p274, %s269, 13
      %s276 = smul.addr %s275, 8
      %s277 = scalar_lea.vmem %s1, %s276
      %p278 = pneg %p89
      %p279 = pneg %p86
      %s280 = smul.u32 %s18, 2
      %s281 = sadd.s32 %s280, %s19
      %p282 = scmp.lt.s32.totalorder %s281, 3
      %s283 = scalar_select %p282, %s281, 3
      %s284 = smul.u32 4, %s283
      %s285 = ssub.s32 14, %s284
      %p286 = scmp.lt.s32.totalorder %s285, 4
      %s287 = scalar_select %p286, %s285, 4
      %s288 = smul.u32 128, %s287
      %p289 = scmp.lt.s32.totalorder %s284, 13
      %s290 = scalar_select %p289, %s284, 13
      %s291 = smul.addr %s290, 8
      %s292 = scalar_lea.vmem %s2, %s291
      %p293 = pneg %p123
      %p294 = pneg %p120
      %p295 = pneg %p149
      %p296 = pneg %p146
      %p297 = scmp.lt.s32.totalorder %s18, 1
      %s298 = scalar_select %p297, %s18, 1
      %s299 = scalar_lea.vmem %s3, %s298
      %s300 = smul.u32 %s18, 2
      %s301 = sadd.s32 %s300, %s19
      %p302 = scmp.lt.s32.totalorder %s301, 3
      %s303 = scalar_select %p302, %s301, 3
      %s304 = smul.u32 4, %s303
      %s305 = ssub.s32 14, %s304
      %p306 = scmp.lt.s32.totalorder %s305, 4
      %s307 = scalar_select %p306, %s305, 4
      %s308 = smul.u32 128, %s307
      %p309 = scmp.lt.s32.totalorder %s304, 13
      %s310 = scalar_select %p309, %s304, 13
      %s311 = smul.addr %s310, 8
      %s312 = scalar_lea.vmem %s0, %s311
      %s313 = smul.u32 %s18, 2
      %s314 = sadd.s32 %s313, %s19
      %p315 = scmp.lt.s32.totalorder %s314, 3
      %s316 = scalar_select %p315, %s314, 3
      %s317 = smul.u32 4, %s316
      %s318 = ssub.s32 14, %s317
      %p319 = scmp.lt.s32.totalorder %s318, 4
      %s320 = scalar_select %p319, %s318, 4
      %s321 = smul.u32 128, %s320
      %s322 = smul.u32 %s18, 2
      %s323 = sadd.s32 %s322, %s19
      %p324 = scmp.lt.s32.totalorder %s323, 3
      %s325 = scalar_select %p324, %s323, 3
      %s326 = smul.u32 4, %s325
      %s327 = ssub.s32 14, %s326
      %p328 = scmp.lt.s32.totalorder %s327, 4
      %s329 = scalar_select %p328, %s327, 4
      %s330 = smul.u32 128, %s329
      %p331 = scmp.lt.s32.totalorder %s326, 13
      %s332 = scalar_select %p331, %s326, 13
      %s333 = smul.addr %s332, 8
      %s334 = scalar_lea.vmem %s1, %s333
      %s335 = smul.u32 %s18, 2
      %s336 = sadd.s32 %s335, %s19
      %p337 = scmp.lt.s32.totalorder %s336, 3
      %s338 = scalar_select %p337, %s336, 3
      %s339 = smul.u32 4, %s338
      %s340 = ssub.s32 14, %s339
      %p341 = scmp.lt.s32.totalorder %s340, 4
      %s342 = scalar_select %p341, %s340, 4
      %s343 = smul.u32 128, %s342
      %s344 = smul.u32 %s18, 2
      %s345 = sadd.s32 %s344, %s19
      %p346 = scmp.lt.s32.totalorder %s345, 3
      %s347 = scalar_select %p346, %s345, 3
      %s348 = smul.u32 4, %s347
      %s349 = ssub.s32 14, %s348
      %p350 = scmp.lt.s32.totalorder %s349, 4
      %s351 = scalar_select %p350, %s349, 4
      %s352 = smul.u32 128, %s351
      %p353 = scmp.lt.s32.totalorder %s348, 13
      %s354 = scalar_select %p353, %s348, 13
      %s355 = smul.addr %s354, 8
      %s356 = scalar_lea.vmem %s2, %s355
      %s357 = smul.u32 %s18, 2
      %s358 = sadd.s32 %s357, %s19
      %p359 = scmp.lt.s32.totalorder %s358, 3
      %s360 = scalar_select %p359, %s358, 3
      %s361 = smul.u32 4, %s360
      %s362 = ssub.s32 14, %s361
      %p363 = scmp.lt.s32.totalorder %s362, 4
      %s364 = scalar_select %p363, %s362, 4
      %s365 = smul.u32 128, %s364
      %p366 = scmp.lt.s32.totalorder %s18, 1
      %s367 = scalar_select %p366, %s18, 1
      %s368 = scalar_lea.vmem %s3, %s367
      %p369 = scmp.eq.s32.totalorder %s19, 0
      // Predicated region
      $region33: #{tpu_custom_call.1} parent=31 // pred_check
        %p370 = pneg %p369
      $region34: #{tpu_custom_call.1} parent=31 // pred_check_branch
        %372 = sbr.rel (%p370) target = $region36
      $region35: #{tpu_custom_call.1} parent=31 // pred_region
        %vm373 = vcmask 7168
        %374 = vst.msk [vmem:[#allocation2] sm:$0xff] %vm373, 0.0
        %375 = vst.msk [vmem:[#allocation2 + $0x8] sm:$0xff] %vm373, 0.0
        %376 = vst.msk [vmem:[#allocation2 + $0x10] sm:$0xff] %vm373, 0.0
        %377 = vst.msk [vmem:[#allocation2 + $0x18] sm:$0xff] %vm373, 0.0
      $region36: #{tpu_custom_call.1} parent=31 // pred_fallthru
        _
      %v378 = vld [vmem:[%s312] sm:$0xff]
      %v379 = vld [vmem:[%s312 + $0x8] sm:$0xff]
      %v380 = vld [vmem:[%s312 + $0x10] sm:$0xff]
      %v381 = vld [vmem:[%s312 + $0x18] sm:$0xff]
      %v382 = vld [vmem:[%s334] sm:$0xff]
      %v383 = vld [vmem:[%s334 + $0x8] sm:$0xff]
      %v384 = vld [vmem:[%s334 + $0x10] sm:$0xff]
      %v385 = vld [vmem:[%s334 + $0x18] sm:$0xff]
      %v386 = vld [vmem:[%s356] sm:$0xff]
      %v387 = vld [vmem:[%s356 + $0x8] sm:$0xff]
      %v388 = vld [vmem:[%s356 + $0x10] sm:$0xff]
      %v389 = vld [vmem:[%s356 + $0x18] sm:$0xff]
      %vm390 = vcmask 261120
      %v391 = vsel %vm390, %v378, -inf
      %392 = vmax.xlane.f32.xlu0 %v391
      %v393 = vpop.xlane.xlu0 %392
      %v394 = vsel %vm390, %v379, -inf
      %395 = vmax.xlane.f32.xlu0 %v394
      %v396 = vpop.xlane.xlu0 %395
      %v397 = vsel %vm390, %v380, -inf
      %398 = vmax.xlane.f32.xlu0 %v397
      %v399 = vpop.xlane.xlu0 %398
      %v400 = vsel %vm390, %v381, -inf
      %401 = vmax.xlane.f32.xlu0 %v400
      %v402 = vpop.xlane.xlu0 %401
      %v403 = vsub.f32 %v378, %v393
      %v404 = vsub.f32 %v379, %v396
      %v405 = vsub.f32 %v380, %v399
      %v406 = vsub.f32 %v381, %v402
      %v407 = vmul.f32 %v403, 1.442695
      %v408 = vpow.pop %v407
      %v409 = vmul.f32 %v404, 1.442695
      %v410 = vpow.pop %v409
      %v411 = vmul.f32 %v405, 1.442695
      %v412 = vpow.pop %v411
      %v413 = vmul.f32 %v406, 1.442695
      %v414 = vpow.pop %v413
      %v415 = vsel %vm390, %v408, 0.0
      %416 = vadd.xlane.f32.xlu0 %v415
      %v417 = vpop.xlane.xlu0 %416
      %v418 = vsel %vm390, %v410, 0.0
      %419 = vadd.xlane.f32.xlu0 %v418
      %v420 = vpop.xlane.xlu0 %419
      %v421 = vsel %vm390, %v412, 0.0
      %422 = vadd.xlane.f32.xlu0 %v421
      %v423 = vpop.xlane.xlu0 %422
      %v424 = vsel %vm390, %v414, 0.0
      %425 = vadd.xlane.f32.xlu0 %v424
      %v426 = vpop.xlane.xlu0 %425
      %v427 = vlog2.pop %v417
      %v428 = vmul.f32 %v427, 0.6931472
      %v429 = vlog2.pop %v420
      %v430 = vmul.f32 %v429, 0.6931472
      %v431 = vlog2.pop %v423
      %v432 = vmul.f32 %v431, 0.6931472
      %v433 = vlog2.pop %v426
      %v434 = vmul.f32 %v433, 0.6931472
      %v435 = vlaneseq
      %v436 = vand.u32 %v435, 127
      %437 = vset.pattern.permute.xlu0 0
      %438 = vperm.xlu0 %437, %v382
      %v439 = vpop.permute.xlu0 %438
      %440 = vset.pattern.permute.xlu0 0
      %441 = vperm.xlu0 %440, %v383
      %v442 = vpop.permute.xlu0 %441
      %443 = vset.pattern.permute.xlu0 0
      %444 = vperm.xlu0 %443, %v384
      %v445 = vpop.permute.xlu0 %444
      %446 = vset.pattern.permute.xlu0 0
      %447 = vperm.xlu0 %446, %v385
      %v448 = vpop.permute.xlu0 %447
      %vm449 = vcmp.eq.s32.totalorder %v436, %v439
      %vm450 = vcmp.eq.s32.totalorder %v436, %v442
      %vm451 = vcmp.eq.s32.totalorder %v436, %v445
      %vm452 = vcmp.eq.s32.totalorder %v436, %v448
      %v453 = vsel %vm449, %v403, 0.0
      %v454 = vsel %vm450, %v404, 0.0
      %v455 = vsel %vm451, %v405, 0.0
      %v456 = vsel %vm452, %v406, 0.0
      %v457 = vsel %vm390, %v453, 0.0
      %458 = vadd.xlane.f32.xlu0 %v457
      %v459 = vpop.xlane.xlu0 %458
      %v460 = vsel %vm390, %v454, 0.0
      %461 = vadd.xlane.f32.xlu0 %v460
      %v462 = vpop.xlane.xlu0 %461
      %v463 = vsel %vm390, %v455, 0.0
      %464 = vadd.xlane.f32.xlu0 %v463
      %v465 = vpop.xlane.xlu0 %464
      %v466 = vsel %vm390, %v456, 0.0
      %467 = vadd.xlane.f32.xlu0 %v466
      %v468 = vpop.xlane.xlu0 %467
      %v469 = vsub.f32 %v428, %v459
      %v470 = vsub.f32 %v430, %v462
      %v471 = vsub.f32 %v432, %v465
      %v472 = vsub.f32 %v434, %v468
      %s473 = smul.u32 %s18, 2
      %s474 = sadd.s32 %s473, %s19
      %s475 = smul.u32 %s474, 32
      %v476 = vlaneseq
      %v477 = vshrl.u32 %v476, 7
      %v478 = vadd.s32 %v477, 8
      %v479 = vadd.s32 %v477, 16
      %v480 = vadd.s32 %v477, 24
      %v481 = vstv %s475
      %v482 = vadd.s32 %v481, %v477
      %v483 = vadd.s32 %v481, %v478
      %v484 = vadd.s32 %v481, %v479
      %v485 = vadd.s32 %v481, %v480
      %vm486 = vcmp.lt.s32.totalorder %v482, 112
      %vm487 = vcmp.lt.s32.totalorder %v483, 112
      %vm488 = vcmp.lt.s32.totalorder %v484, 112
      %vm489 = vcmp.lt.s32.totalorder %v485, 112
      %vm490 = vcmp.ne.s32.totalorder %v382, 4294967295
      %vm491 = vcmp.ne.s32.totalorder %v383, 4294967295
      %vm492 = vcmp.ne.s32.totalorder %v384, 4294967295
      %vm493 = vcmp.ne.s32.totalorder %v385, 4294967295
      %vm494 = vmand %vm486, %vm490
      %vm495 = vmand %vm487, %vm491
      %vm496 = vmand %vm488, %vm492
      %vm497 = vmand %vm489, %vm493
      %v498 = vld [vmem:[#allocation2] sm:$0xff]
      %v499 = vld [vmem:[#allocation2 + $0x8] sm:$0xff]
      %v500 = vld [vmem:[#allocation2 + $0x10] sm:$0xff]
      %v501 = vld [vmem:[#allocation2 + $0x18] sm:$0xff]
      %v502 = vmul.f32 %v386, %v469
      %v503 = vmul.f32 %v387, %v470
      %v504 = vmul.f32 %v388, %v471
      %v505 = vmul.f32 %v389, %v472
      %v506 = vsel %vm494, %v502, 0.0
      %v507 = vsel %vm495, %v503, 0.0
      %v508 = vsel %vm496, %v504, 0.0
      %v509 = vsel %vm497, %v505, 0.0
      %v510 = vadd.f32 %v498, %v506
      %v511 = vadd.f32 %v499, %v507
      %v512 = vadd.f32 %v500, %v508
      %v513 = vadd.f32 %v501, %v509
      %vm514 = vcmask 7168
      %515 = vst.msk [vmem:[#allocation2] sm:$0xff] %vm514, %v510
      %516 = vst.msk [vmem:[#allocation2 + $0x8] sm:$0xff] %vm514, %v511
      %517 = vst.msk [vmem:[#allocation2 + $0x10] sm:$0xff] %vm514, %v512
      %518 = vst.msk [vmem:[#allocation2 + $0x18] sm:$0xff] %vm514, %v513
      %p519 = scmp.eq.s32.totalorder %s19, 1
      // Predicated region
      $region37: #{tpu_custom_call.1} parent=31 // pred_check
        %p520 = pneg %p519
      $region38: #{tpu_custom_call.1} parent=31 // pred_check_branch
        %522 = sbr.rel (%p520) target = $region40
      $region39: #{tpu_custom_call.1} parent=31 // pred_region
        %v523 = vld [vmem:[#allocation2] sm:$0xff]
        %v524 = vld [vmem:[#allocation2 + $0x8] sm:$0xff]
        %v525 = vld [vmem:[#allocation2 + $0x10] sm:$0xff]
        %v526 = vld [vmem:[#allocation2 + $0x18] sm:$0xff]
        %v527 = vsel %vm514, %v523, 0.0
        %v528 = vsel %vm514, %v524, 0.0
        %v529 = vadd.f32 %v527, %v528
        %v530 = vsel %vm514, %v525, 0.0
        %v531 = vadd.f32 %v529, %v530
        %v532 = vsel %vm514, %v526, 0.0
        %v533 = vadd.f32 %v531, %v532
        %534 = vadd.xlane.f32.xlu0 %v533
        %v535 = vpop.xlane.xlu0 %534
        %v536 = vrot.slane %v535, 4
        %v537 = vadd.f32 %v535, %v536
        %v538 = vrot.slane %v537, 2
        %v539 = vadd.f32 %v537, %v538
        %v540 = vrot.slane %v539, 1
        %v541 = vadd.f32 %v539, %v540
        %s542 = vtos %v541
        %v543 = vstv %s542
        %vm544 = vcmask 0
        %545 = vst.msk [vmem:[%s368] sm:$0x1] %vm544, %v543
      $region40: #{tpu_custom_call.1} parent=31 // pred_fallthru
        _
      %p546 = scmp.lt.s32.totalorder %s18, 1
      %s547 = scalar_select %p546, %s18, 1
      %s548 = scalar_lea.vmem %s3, %s547
      // Predicated region
      $region41: #{tpu_custom_call.1} parent=31 // pred_check
        %p549 = pneg %p146
      $region42: #{tpu_custom_call.1} parent=31 // pred_check_branch
        %551 = sbr.rel (%p549) target = $region44
      $region43: #{tpu_custom_call.1} parent=31 // pred_region
        _
      $region44: #{tpu_custom_call.1} parent=31 // pred_fallthru
        _
    $region32: #{tpu_custom_call.1} parent=5 // pred_fallthru
      _
    %p552 = scmp.le.s32.totalorder 2, %s9
    // Predicated region
    $region45: #{tpu_custom_call.1} parent=5 // pred_check
      %p553 = pneg %p552
    $region46: #{tpu_custom_call.1} parent=5 // pred_check_branch
      %555 = sbr.rel (%p553) target = $region48
    $region47: #{tpu_custom_call.1} parent=5 // pred_region
      %s556 = ssub.s32 %s9, 2
      // Predicated region
      $region49: #{tpu_custom_call.1} parent=47 // pred_check
        %p557 = pneg %p152
      $region50: #{tpu_custom_call.1} parent=47 // pred_check_branch
        %559 = sbr.rel (%p557) target = $region52
      $region51: #{tpu_custom_call.1} parent=47 // pred_region
        %p560 = scmp.lt.s32.totalorder %s20, 1
        %s561 = scalar_select %p560, %s20, 1
        %s562 = scalar_lea.vmem %s3, %s561
      $region52: #{tpu_custom_call.1} parent=47 // pred_fallthru
        _
    $region48: #{tpu_custom_call.1} parent=5 // pred_fallthru
      _
  $region6: #{tpu_custom_call.1} parent=0 // loop_footer
    %s13 = sadd.s32 1, %s9
  $region7: #{tpu_custom_call.1} parent=0 // loop_footer_branch
    %8 = sbr.rel target = $region3
  $region8: #{tpu_custom_call.1} parent=0 // loop_exit
    _

</llo_original>
